<compile_context>
chip_gen: v5e
topology: v5e:2x2
jax: 0.10.0
libtpu: 0.0.40
codegen_flags: <defaults>
</compile_context>

<pallas_src>
from functools import partial

import jax
import jax.numpy as jnp
import numpy as np
from jax.experimental import pallas as pl
from jax.experimental.pallas import tpu as pltpu


def _masked_bce_kernel(scalars_ref, y_true_ref, y_pred_ref, out_ref):
    """Streaming elementwise stable balanced BCE.

    scalars_ref : SMEM (2,) f32 = [bw, 1 - 2*bw]   (scalar-prefetched)
    y_true_ref  : VMEM (TM, W) tile of targets (native dtype)
    y_pred_ref  : VMEM (TM, W) tile of logits  (native dtype)
    out_ref     : VMEM (TM, W) tile of per-element costs (f32)
    """
    t = y_true_ref[...].astype(jnp.float32)
    x = y_pred_ref[...].astype(jnp.float32)
    bw = scalars_ref[0]
    one_minus_2bw = scalars_ref[1]

    # Numerically stable BCE-with-logits, softplus form (1x exp + 1x log1p per element, EUP slot).
    loss = jnp.maximum(x, 0.0) - x * t + jnp.log1p(jnp.exp(-jnp.abs(x)))

    # Balanced class weighting folded into a single fused scale.
    out_ref[...] = (loss * (bw + t * one_minus_2bw)).astype(out_ref.dtype)


def _round_up(x, m):
    return ((x + m - 1) // m) * m


def _lane_dense_shape(total):
    """(rows, width, pad) for a lane-dense 2-D slab: width multiple of 128, rows multiple of 8."""
    for w in (1024, 512, 256, 128):
        if total % (8 * w) == 0:
            return total // w, w, 0
    w = 1024
    padded = _round_up(total, 8 * w)
    return padded // w, w, padded - total


def _pick_tile_rows(R, W, target_bytes=4 * 1024 * 1024):
    """Rows per tile: ~4 MiB f32 per stream (3 streams x 2 bufs = 24 MiB < 32 MiB limit),
    multiple of 8; capped at ~R/2 so the grid has >=2 steps for v7x megacore sharding."""
    rows = max(8, (target_bytes // (W * 4)) // 8 * 8)
    if rows >= R:
        if R > 8:
            rows = min(R, _round_up(-(-R // 2), 8))
        else:
            rows = R
    return min(rows, R)


@partial(jax.jit, static_argnames=("auto_bw",))
def _masked_bce_device(y_true, y_pred, mask_flat, bw_in, auto_bw):
    M, N = y_true.shape
    total = M * N

    # Balance weight: sum(t) + sum(1-t) == M*N identically, so bw == mean(y_true).
    # Reduction reads the native (possibly narrow) dtype with f32 accumulation.
    if auto_bw:
        bw = jnp.sum(y_true, dtype=jnp.float32) / jnp.float32(total)
    else:
        bw = bw_in.astype(jnp.float32)
    scalars = jnp.stack([bw, 1.0 - 2.0 * bw]).astype(jnp.float32)

    # Lane-dense slab (op is purely elementwise -> layout plumbing only; pad only if unavoidable).
    R, W, pad = _lane_dense_shape(total)
    yt = y_true.reshape(-1)
    yp = y_pred.reshape(-1)
    if pad:
        yt = jnp.pad(yt, (0, pad))   # zero pad -> exp/log1p stay finite; dropped by the final slice
        yp = jnp.pad(yp, (0, pad))
    yt = yt.reshape(R, W)
    yp = yp.reshape(R, W)

    TM = _pick_tile_rows(R, W)
    grid = (pl.cdiv(R, TM),)

    bytes_accessed = int(total * (np.dtype(y_true.dtype).itemsize
                                  + np.dtype(y_pred.dtype).itemsize + 4))
    cost = pl.CostEstimate(flops=8 * total, transcendentals=2 * total,
                           bytes_accessed=bytes_accessed)

    costs = pl.pallas_call(
        _masked_bce_kernel,
        out_shape=jax.ShapeDtypeStruct((R, W), jnp.float32),
        grid_spec=pltpu.PrefetchScalarGridSpec(
            num_scalar_prefetch=1,
            grid=grid,
            in_specs=[
                pl.BlockSpec((TM, W), lambda i, s: (i, 0)),
                pl.BlockSpec((TM, W), lambda i, s: (i, 0)),
            ],
            out_specs=pl.BlockSpec((TM, W), lambda i, s: (i, 0)),
        ),
        compiler_params=pltpu.CompilerParams(
            dimension_semantics=("parallel",),
            vmem_limit_bytes=32 * 1024 * 1024,
        ),
        cost_estimate=cost,
    )(scalars, yt, yp)

    flat = costs.reshape(-1)[:total]

    # masked_select compaction: stable key-sort carrying the costs payload (selected elements sort
    # to the front in original row-major order). Replaces the previous cumsum + dynamic scatter.
    key = jnp.where(mask_flat, jnp.int32(0), jnp.int32(1))
    _, compact = jax.lax.sort((key, flat), is_stable=True, num_keys=1)
    count = jnp.sum(mask_flat.astype(jnp.int32))
    return compact, count


def masked_bce_loss(y_true, y_pred, sw, balance_weight=None):
    """Pallas implementation of MaskedBCELoss.forward.

    y_true, y_pred : (M, N) arrays (any float dtype; streamed in native dtype, math is f32 in-kernel)
    sw             : mask broadcastable to (M*N, 1) (nonzero == selected)
    Returns a 1-D array of selected per-element costs (torch.masked_select semantics).
    """
    y_true = jnp.asarray(y_true)
    y_pred = jnp.asarray(y_pred)
    M, N = y_true.shape
    mask_flat = jnp.broadcast_to(jnp.asarray(sw) != 0, (M * N, 1)).reshape(-1)

    if balance_weight is None:
        compact, count = _masked_bce_device(
            y_true, y_pred, mask_flat, jnp.asarray(0.0, jnp.float32), auto_bw=True)
    else:
        compact, count = _masked_bce_device(
            y_true, y_pred, mask_flat, jnp.asarray(balance_weight, jnp.float32), auto_bw=False)

    # TODO(synk): torch.masked_select has a data-dependent output length; a single scalar count is
    # synced to host to slice the device-compacted buffer (no full-array transfer).
    n_sel = int(count)
    return compact[:n_sel]


def _reference(y_true, y_pred, sw, balance_weight=None):
    t = np.asarray(y_true, dtype=np.float32)
    x = np.asarray(y_pred, dtype=np.float32)
    if balance_weight is None:
        num_pos = t.sum()
        num_neg = (1.0 - t).sum()
        bw = num_pos / (num_pos + num_neg)
    else:
        bw = balance_weight
    max_val = np.maximum(-x, 0.0)
    loss = x - x * t + max_val + np.log(np.exp(-max_val) + np.exp(-x - max_val))
    costs = ((1.0 - bw) * loss * t + bw * loss * (1.0 - t)).reshape(-1, 1)
    mask = np.broadcast_to(np.asarray(sw).astype(bool), costs.shape)
    return costs[mask]


if __name__ == "__main__":
    # Shapes implied by the RVOS/oagcnn usage: batch=2, T=4 instances, 16x16 masks.
    B, T, H, W = 2, 4, 16, 16
    M, N = B * T, H * W  # (8, 256)

    key = jax.random.PRNGKey(0)
    k1, k2, k3 = jax.random.split(key, 3)
    y_pred = jax.random.normal(k1, (M, N), dtype=jnp.float32)                    # logits
    y_true = (jax.random.uniform(k2, (M, N)) > 0.5).astype(jnp.float32)          # binary GT mask
    sw = (jax.random.uniform(k3, (M * N, 1)) > 0.5).astype(jnp.float32)          # selection mask

    # 1) Auto balance weight (balance_weight=None) path, f32 inputs.
    out = masked_bce_loss(y_true, y_pred, sw, balance_weight=None)
    out = jax.block_until_ready(out)
    ref = _reference(y_true, y_pred, sw, None)
    assert out.shape == ref.shape, (out.shape, ref.shape)
    np.testing.assert_allclose(np.asarray(out), ref, rtol=1e-5, atol=1e-5)

    # 2) User-supplied balance weight path, f32 inputs.
    out2 = masked_bce_loss(y_true, y_pred, sw, balance_weight=0.3)
    out2 = jax.block_until_ready(out2)
    ref2 = _reference(y_true, y_pred, sw, 0.3)
    assert out2.shape == ref2.shape, (out2.shape, ref2.shape)
    np.testing.assert_allclose(np.asarray(out2), ref2, rtol=1e-5, atol=1e-5)

    # 3) Narrow-dtype path: bf16 inputs streamed as-is, f32 math in-kernel.
    y_pred_bf16 = y_pred.astype(jnp.bfloat16)
    y_true_bf16 = y_true.astype(jnp.bfloat16)
    out3 = masked_bce_loss(y_true_bf16, y_pred_bf16, sw, balance_weight=0.25)
    out3 = jax.block_until_ready(out3)
    ref3 = _reference(np.asarray(y_true_bf16.astype(jnp.float32)),
                      np.asarray(y_pred_bf16.astype(jnp.float32)), sw, 0.25)
    assert out3.shape == ref3.shape, (out3.shape, ref3.shape)
    np.testing.assert_allclose(np.asarray(out3), ref3, rtol=1e-5, atol=1e-5)

    print("KERNEL_OK")
</pallas_src>

<mosaic_0001>
module attributes {stable_mosaic.version = 11 : i64} {
  func.func @_masked_bce_kernel(%arg0: i32, %arg1: memref<2xf32, #tpu.memory_space<smem>>, %arg2: memref<8x256xf32, #tpu.memory_space<vmem>>, %arg3: memref<8x256xf32, #tpu.memory_space<vmem>>, %arg4: memref<8x256xf32, #tpu.memory_space<vmem>>) attributes {dimension_semantics = [#tpu.dimension_semantics<parallel>], iteration_bounds = array<i64: 1>, scalar_prefetch = 1 : i64, scratch_operands = 0 : i64, tpu.core_type = #tpu.core_type<tc>, window_params = [{transform_indices = @transform_0, window_bounds = array<i64: 8, 256>}, {transform_indices = @transform_1, window_bounds = array<i64: 8, 256>}, {transform_indices = @transform_2, window_bounds = array<i64: 8, 256>}]} {
    %c0 = arith.constant 0 : index
    %c0_0 = arith.constant 0 : index
    %0 = vector.load %arg2[%c0, %c0_0] : memref<8x256xf32, #tpu.memory_space<vmem>>, vector<8x256xf32>
    %c0_1 = arith.constant 0 : index
    %c0_2 = arith.constant 0 : index
    %1 = vector.load %arg3[%c0_1, %c0_2] : memref<8x256xf32, #tpu.memory_space<vmem>>, vector<8x256xf32>
    %c0_3 = arith.constant 0 : index
    %2 = memref.load %arg1[%c0_3] : memref<2xf32, #tpu.memory_space<smem>>
    %c1 = arith.constant 1 : index
    %3 = memref.load %arg1[%c1] : memref<2xf32, #tpu.memory_space<smem>>
    %cst = arith.constant 0.000000e+00 : f32
    %4 = vector.broadcast %cst : f32 to vector<8x256xf32>
    %5 = arith.maximumf %1, %4 : vector<8x256xf32>
    %6 = arith.mulf %1, %0 : vector<8x256xf32>
    %7 = arith.subf %5, %6 : vector<8x256xf32>
    %8 = math.absf %1 : vector<8x256xf32>
    %cst_4 = arith.constant 0.000000e+00 : f32
    %9 = vector.broadcast %cst_4 : f32 to vector<8x256xf32>
    %10 = arith.subf %9, %8 : vector<8x256xf32>
    %11 = math.exp %10 : vector<8x256xf32>
    %12 = math.log1p %11 : vector<8x256xf32>
    %13 = arith.addf %7, %12 : vector<8x256xf32>
    %14 = vector.broadcast %3 : f32 to vector<8x256xf32>
    %15 = arith.mulf %0, %14 : vector<8x256xf32>
    %16 = vector.broadcast %2 : f32 to vector<8x256xf32>
    %17 = arith.addf %16, %15 : vector<8x256xf32>
    %18 = arith.mulf %13, %17 : vector<8x256xf32>
    %c0_5 = arith.constant 0 : index
    %c0_6 = arith.constant 0 : index
    %19 = vector.load %arg4[%c0_5, %c0_6] : memref<8x256xf32, #tpu.memory_space<vmem>>, vector<8x256xf32>
    tpu.vector_store %arg4[%c0_5, %c0_6], %18 {strides = array<i32>} : memref<8x256xf32, #tpu.memory_space<vmem>>, vector<8x256xf32>,
    return
  }
  func.func @transform_0(%arg0: i32, %arg1: memref<2xf32, #tpu.memory_space<smem>>) -> (i32, i32) {
    %c0_i32 = arith.constant 0 : i32
    %c0_i32_0 = arith.constant 0 : i32
    return %arg0, %c0_i32 : i32, i32
  }
  func.func @transform_1(%arg0: i32, %arg1: memref<2xf32, #tpu.memory_space<smem>>) -> (i32, i32) {
    %c0_i32 = arith.constant 0 : i32
    %c0_i32_0 = arith.constant 0 : i32
    return %arg0, %c0_i32 : i32, i32
  }
  func.func @transform_2(%arg0: i32, %arg1: memref<2xf32, #tpu.memory_space<smem>>) -> (i32, i32) {
    %c0_i32 = arith.constant 0 : i32
    %c0_i32_0 = arith.constant 0 : i32
    return %arg0, %c0_i32 : i32, i32
  }
}

</mosaic_0001>

<llo_original>
// kernel: _masked_bce_device.1
$region0: #{_masked_bce_device.1}
  #allocation0 [shape = 'u32[]', space=smem, size = 0x4, offset = 0x4, fixed_abs, tag = 'smem constant byte address 0x4 - core index']
  #allocation1 [shape = 'u32[72,128]{1,0:T(1,128)}', space=vmem, size = 0x9000, scoped, tag = 'internal scratch']
  #allocation2 [shape = 's32[1]{0}', space=sflag, size = 0x4, scoped, tag = 'scoped memory for _masked_bce_device.1']
  #allocation3 [shape = 'u8[512]{0}', space=smem, size = 0x200, scoped, tag = 'prefetched SMEM operand 0']
  %s0 = inlined_call_operand.vmem [shape: f32[2], index: 0, kind: input, shape index: {}]
  %s1 = inlined_call_operand.vmem [shape: f32[8,256], index: 1, kind: input, shape index: {}]
  %s2 = inlined_call_operand.hbm [shape: f32[8,256], index: 2, kind: input, shape index: {}]
  %s3 = inlined_call_operand.vmem [shape: f32[8,256], index: 3, kind: output, shape index: {}]
  %s4 = sld [smem:[#allocation0]]
  $region22: #{_masked_bce_device.1} parent=0
    _
  %s6 = ssub.s32 1, %s4
  %s7 = scalar_select 0, %s6, %s4
  %s9 = sshll.u32 %s0, 4
  %s10 = int_to_ptr.vmem [resolvable:$true] %s9
  %12 = dma.vmem_to_smem %s10, 16, [#allocation3], [#allocation2]
  %14 = dma.done [#allocation2], 16
  %15 = sfence
  $region1: #{_masked_bce_device.1} parent=0
    #allocation4 [shape = 'u8[8192]{0}', space=vmem, size = 0x2000, scoped, tag = 'input window, operand 2, single buffered']
    #allocation5 [shape = 's32[1]{0}', space=sflag, size = 0x4, scoped, tag = 'scoped memory for _masked_bce_device.1']
    %16 = vsyncpa [#allocation5], 0
    // Predicated region
    $region2: #{_masked_bce_device.1} parent=1 // pred_check
      _
    $region3: #{_masked_bce_device.1} parent=1 // pred_check_branch
      %18 = sbr.rel (0) target = $region5
    $region4: #{_masked_bce_device.1} parent=1 // pred_region
      _
    $region5: #{_masked_bce_device.1} parent=1 // pred_fallthru
      _
    // Predicated region
    $region6: #{_masked_bce_device.1} parent=1 // pred_check
      _
    $region7: #{_masked_bce_device.1} parent=1 // pred_check_branch
      %20 = sbr.rel (0) target = $region9
    $region8: #{_masked_bce_device.1} parent=1 // pred_region
      %22 = vsyncadd [#allocation5], 0
      %s24 = sshll.u32 %s2, 4
      %s25 = int_to_ptr.hbm [resolvable:$true] %s24
      %s26 = sshll.u32 [#allocation4], 4
      %s27 = int_to_ptr.vmem [resolvable:$true] %s26
      %29 = dma.hbm_to_vmem [thread:$0]  %s25, 256, %s27, [#allocation5]
    $region9: #{_masked_bce_device.1} parent=1 // pred_fallthru
      _
    // Predicated region
    $region10: #{_masked_bce_device.1} parent=1 // pred_check
      _
    $region11: #{_masked_bce_device.1} parent=1 // pred_check_branch
      %31 = sbr.rel (0) target = $region13
    $region12: #{_masked_bce_device.1} parent=1 // pred_region
      %33 = dma.done [#allocation5], 256
    $region13: #{_masked_bce_device.1} parent=1 // pred_fallthru
      _
    %v34 = vld [vmem:[%s1] sm:$0xff]
    %v35 = vld [vmem:[%s1 + $0x8] sm:$0xff]
    %v36 = vld [vmem:[#allocation4] sm:$0xff]
    %v37 = vld [vmem:[#allocation4 + $0x8] sm:$0xff]
    %s38 = sld [smem:[#allocation3]]
    %s39 = sld [smem:[#allocation3 + $0x1]]
    %v40 = vmax.f32 %v36, 0.0
    %v41 = vmax.f32 %v37, 0.0
    %v42 = vmul.f32 %v36, %v34
    %v43 = vmul.f32 %v37, %v35
    %v44 = vsub.f32 %v40, %v42
    %v45 = vsub.f32 %v41, %v43
    %v46 = vand.u32 2147483647, %v36
    %v47 = vand.u32 2147483647, %v37
    %v48 = vsub.f32 0.0, %v46
    %v49 = vsub.f32 0.0, %v47
    %v50 = vmul.f32 %v48, 1.442695
    %v51 = vpow.pop %v50
    %v52 = vmul.f32 %v49, 1.442695
    %v53 = vpow.pop %v52
    %v54 = vadd.f32 %v51, 1.0
    %v55 = vlog2.pop %v54
    %v56 = vmul.f32 %v55, 0.6931472
    %v57 = vmul.f32 -0.5, %v51
    %v58 = vadd.f32 %v57, 1.0
    %v59 = vmul.f32 %v58, %v51
    %v60 = vand.u32 2147483647, %v51
    %vm61 = vcmp.lt.f32.partialorder %v60, 0.0004427343
    %v62 = vsel %vm61, %v59, %v56
    %v63 = vadd.f32 %v53, 1.0
    %v64 = vlog2.pop %v63
    %v65 = vmul.f32 %v64, 0.6931472
    %v66 = vmul.f32 -0.5, %v53
    %v67 = vadd.f32 %v66, 1.0
    %v68 = vmul.f32 %v67, %v53
    %v69 = vand.u32 2147483647, %v53
    %vm70 = vcmp.lt.f32.partialorder %v69, 0.0004427343
    %v71 = vsel %vm70, %v68, %v65
    %v72 = vadd.f32 %v44, %v62
    %v73 = vadd.f32 %v45, %v71
    %v74 = vstv %s39
    %v75 = vmul.f32 %v34, %v74
    %v76 = vmul.f32 %v35, %v74
    %v77 = vstv %s38
    %v78 = vadd.f32 %v77, %v75
    %v79 = vadd.f32 %v77, %v76
    %v80 = vmul.f32 %v72, %v78
    %v81 = vmul.f32 %v73, %v79
    %82 = vst [vmem:[%s3] sm:$0xff] %v80
    %83 = vst [vmem:[%s3 + $0x8] sm:$0xff] %v81
    // Predicated region
    $region14: #{_masked_bce_device.1} parent=1 // pred_check
      _
    $region15: #{_masked_bce_device.1} parent=1 // pred_check_branch
      %85 = sbr.rel (0) target = $region17
    $region16: #{_masked_bce_device.1} parent=1 // pred_region
      _
    $region17: #{_masked_bce_device.1} parent=1 // pred_fallthru
      _
    // Predicated region
    $region18: #{_masked_bce_device.1} parent=1 // pred_check
      _
    $region19: #{_masked_bce_device.1} parent=1 // pred_check_branch
      %87 = sbr.rel (0) target = $region21
    $region20: #{_masked_bce_device.1} parent=1 // pred_region
      _
    $region21: #{_masked_bce_device.1} parent=1 // pred_fallthru
      _
    %88 = vsyncpa [#allocation5], 1

</llo_original>
